<compile_context>
chip_gen: v7x
topology: tpu7x:2x2x1
jax: 0.10.0
libtpu: 0.0.40
codegen_flags: <defaults>
</compile_context>

<pallas_src>
import functools

import jax
import jax.numpy as jnp
from jax.experimental import pallas as pl
from jax.experimental.pallas import tpu as pltpu

_LANE = 128


# -----------------------------------------------------------------------------
# Kernels
# -----------------------------------------------------------------------------
def _elementwise_loss_kernel(x_ref, t_ref, o_ref, *, type_loss, regression):
    """L1/L2 loss on one (tile_rows, W) block; output has the same shape."""
    x = x_ref[...].astype(jnp.float32)
    t = t_ref[...].astype(jnp.float32)
    if not regression:
        m = jnp.max(x, axis=-1, keepdims=True)
        e = jnp.exp(x - m)
        x = e / jnp.sum(e, axis=-1, keepdims=True)      # exact softmax (parity)
    d = x - t
    v = jnp.abs(d) if type_loss == "L1" else d * d
    o_ref[...] = v.astype(o_ref.dtype)


def _elementwise_loss_sum_kernel(x_ref, t_ref, o_ref, *, type_loss, regression,
                                 n_valid):
    """Fused 'sum'/'mean' path: per-tile partial sum -> (1, 1) block per step."""
    x = x_ref[...].astype(jnp.float32)
    t = t_ref[...].astype(jnp.float32)
    rows = x.shape[0]
    if not regression:
        m = jnp.max(x, axis=-1, keepdims=True)
        e = jnp.exp(x - m)
        x = e / jnp.sum(e, axis=-1, keepdims=True)
    d = x - t
    v = jnp.abs(d) if type_loss == "L1" else d * d
    # Mask rows of the ragged last block (garbage / possible NaN) before summing.
    row_ids = pl.program_id(0) * rows + jax.lax.broadcasted_iota(
        jnp.int32, (rows, 1), 0)
    v = jnp.where(row_ids < n_valid, v, 0.0)
    part = jnp.sum(v, axis=-1, keepdims=True)            # lane reduce  -> (rows, 1)
    o_ref[...] = jnp.sum(part, axis=0, keepdims=True)    # sublane reduce -> (1, 1)


def _ce_kernel(x_ref, lab_ref, o_ref):
    """Per-row cross entropy: logsumexp(x) - x[label].  o_ref block: (tile, 1)."""
    x = x_ref[...].astype(jnp.float32)
    lab = lab_ref[...]                                    # (rows, 1) int32 labels
    rows, n_cls = x.shape
    m = jnp.max(x, axis=-1, keepdims=True)
    lse = m + jnp.log(jnp.sum(jnp.exp(x - m), axis=-1, keepdims=True))
    lane = jax.lax.broadcasted_iota(jnp.int32, (rows, n_cls), 1)
    x_sel = jnp.sum(jnp.where(lane == lab, x, 0.0), axis=-1, keepdims=True)
    o_ref[...] = (lse - x_sel).astype(o_ref.dtype)
    # TODO(synk): lane-dense (1, tile) CE output (in-kernel transpose) would give
    # unmasked stores; kept (tile, 1) for lowering robustness (store traffic is
    # only 4 B/row, and its lane padding is accounted for in the VMEM budget).


# -----------------------------------------------------------------------------
# Tiling / VMEM budget helpers
# -----------------------------------------------------------------------------
def _vmem_capacity_bytes():
    try:
        return int(pltpu.get_tpu_info().vmem_capacity_bytes)
    except Exception:
        return 64 * 1024 * 1024          # conservative: v7x per-TC VMEM


def _block_budget_bytes(cap):
    # generation-dependent: ~19 MiB on v7x (64 MiB VMEM), ~38 MiB on v5e/v6e (128 MiB)
    return min(int(cap * 0.30), 48 * 1024 * 1024)


def _compiler_params(block_bytes, cap):
    base = min(int(cap * 0.60), 100 * 1024 * 1024)
    limit = min(int(cap * 0.85), max(base, int(block_bytes) + 4 * 1024 * 1024))
    return pltpu.CompilerParams(
        dimension_semantics=("parallel",),    # rows independent -> megacore sharding
        vmem_limit_bytes=limit,
    )


def _pick_row_tile(n_rows, per_row_bytes, max_tile_rows, block_budget_bytes):
    """Largest legal row tile whose double-buffered blocks fit the budget,
    while leaving >= 2 grid steps (v7x megacore) whenever rows allow."""
    t = int(block_budget_bytes // max(2 * int(per_row_bytes), 1))
    t = max(16, min(t, int(max_tile_rows)))
    # TODO(synk): for huge class dims where even 16 rows overflow VMEM, split the
    # class dim (online softmax / logsumexp) instead of only raising the limit.
    if n_rows >= 32:
        t = min(t, -(-n_rows // 2))          # guarantee >= 2 grid steps
    if t >= n_rows:
        return n_rows                        # single full-extent block (always legal)
    return max(16, (t // 16) * 16)           # multiple of 16: f32 + bf16 packing


# -----------------------------------------------------------------------------
# Wrapper
# -----------------------------------------------------------------------------
def losses_forward(inputs, targets, type_loss="L2", regression=False,
                   reduction="none", max_tile_rows=4096):
    """JAX/Pallas equivalent of losses(type_loss, regression, reduction)(inputs, targets)."""
    inputs = jnp.asarray(inputs)      # keep caller dtype (bf16 ok) -> less HBM traffic
    targets = jnp.asarray(targets)
    n, c = inputs.shape
    cap = _vmem_capacity_bytes()
    budget = _block_budget_bytes(cap)

    if type_loss in ("L1", "L2"):
        out_dtype = jnp.promote_types(inputs.dtype, targets.dtype)
        x, t = inputs, targets
        n_rows, width = n, c
        reshaped = False
        # regression path is purely elementwise: flatten to a lane-dense slab when
        # C is not a multiple of 128 (contiguous reshape is free in XLA).
        if regression and (c % _LANE != 0) and ((n * c) % _LANE == 0):
            width = _LANE
            for cand in (1024, 512, 256):
                if (n * c) % cand == 0:
                    width = cand
                    break
            n_rows = (n * c) // width
            x = inputs.reshape(n_rows, width)
            t = targets.reshape(n_rows, width)
            reshaped = True

        x_sz = x.dtype.itemsize
        t_sz = t.dtype.itemsize

        if reduction in ("sum", "mean"):
            per_row = width * (x_sz + t_sz)
            tile = _pick_row_tile(n_rows, per_row, max_tile_rows, budget)
            num_tiles = pl.cdiv(n_rows, tile)
            block_bytes = 2 * tile * per_row + 2 * 8 * _LANE * 4
            kern = functools.partial(_elementwise_loss_sum_kernel,
                                     type_loss=type_loss, regression=regression,
                                     n_valid=n_rows)
            partials = pl.pallas_call(
                kern,
                out_shape=jax.ShapeDtypeStruct((num_tiles, 1), jnp.float32),
                grid=(num_tiles,),
                in_specs=[pl.BlockSpec((tile, width), lambda i: (i, 0)),
                          pl.BlockSpec((tile, width), lambda i: (i, 0))],
                out_specs=pl.BlockSpec((1, 1), lambda i: (i, 0)),
                compiler_params=_compiler_params(block_bytes, cap),
            )(x, t)
            total = jnp.sum(partials)
            if reduction == "mean":
                total = total / (n * c)
            return total.astype(out_dtype)

        # reduction == 'none' (module default)
        per_row = width * (x_sz + t_sz + jnp.dtype(out_dtype).itemsize)
        tile = _pick_row_tile(n_rows, per_row, max_tile_rows, budget)
        num_tiles = pl.cdiv(n_rows, tile)
        block_bytes = 2 * tile * per_row
        kern = functools.partial(_elementwise_loss_kernel,
                                 type_loss=type_loss, regression=regression)
        out = pl.pallas_call(
            kern,
            out_shape=jax.ShapeDtypeStruct((n_rows, width), out_dtype),
            grid=(num_tiles,),
            in_specs=[pl.BlockSpec((tile, width), lambda i: (i, 0)),
                      pl.BlockSpec((tile, width), lambda i: (i, 0))],
            out_specs=pl.BlockSpec((tile, width), lambda i: (i, 0)),
            compiler_params=_compiler_params(block_bytes, cap),
        )(x, t)
        if reshaped:
            out = out.reshape(n, c)
        return out

    if type_loss == "CE":
        # Reduce dense one-hot targets to int32 labels once wrapper-side (or accept
        # int labels directly) -> 4 B/row streamed instead of another (N, C) array.
        if targets.ndim == inputs.ndim:
            labels = jnp.argmax(targets, axis=-1).astype(jnp.int32)
        else:
            labels = targets.astype(jnp.int32)
        labels = labels.reshape(n, 1)

        # per-row bytes: logits + lane-padded (tile,1) label & output VMEM buffers
        per_row = c * inputs.dtype.itemsize + 2 * _LANE * 4
        tile = _pick_row_tile(n, per_row, max_tile_rows, budget)
        num_tiles = pl.cdiv(n, tile)
        block_bytes = 2 * tile * per_row
        out = pl.pallas_call(
            _ce_kernel,
            out_shape=jax.ShapeDtypeStruct((n, 1), jnp.float32),
            grid=(num_tiles,),
            in_specs=[pl.BlockSpec((tile, c), lambda i: (i, 0)),
                      pl.BlockSpec((tile, 1), lambda i: (i, 0))],
            out_specs=pl.BlockSpec((tile, 1), lambda i: (i, 0)),
            compiler_params=_compiler_params(block_bytes, cap),
        )(inputs, labels)
        return out[:, 0]

    raise ValueError(f"unknown type_loss: {type_loss}")


# -----------------------------------------------------------------------------
# Demo / correctness checks
# -----------------------------------------------------------------------------
if __name__ == "__main__":
    key = jax.random.PRNGKey(0)
    k1, k2, k3, k4, k5 = jax.random.split(key, 5)

    N, C = 8, 32
    logits = jax.random.normal(k1, (N, C), dtype=jnp.float32)
    labels = jax.random.randint(k2, (N,), 0, C)
    onehot = jax.nn.one_hot(labels, C, dtype=jnp.float32)
    reg_targets = jax.random.normal(k3, (N, C), dtype=jnp.float32)

    # default module behaviour: L2, classification (softmax on inputs), reduction='none'
    l2 = losses_forward(logits, onehot, type_loss="L2")
    l1 = losses_forward(logits, onehot, type_loss="L1")
    ce = losses_forward(logits, onehot, type_loss="CE")
    l2_reg = losses_forward(logits, reg_targets, type_loss="L2", regression=True)
    l1_sum = losses_forward(logits, onehot, type_loss="L1", reduction="sum")
    l2_mean = losses_forward(logits, onehot, type_loss="L2", reduction="mean")
    for v in (l2, l1, ce, l2_reg, l1_sum, l2_mean):
        jax.block_until_ready(v)

    # pure-JAX references
    p = jax.nn.softmax(logits, axis=-1)
    ref_l2 = (p - onehot) ** 2
    ref_l1 = jnp.abs(p - onehot)
    ref_ce = (jax.nn.logsumexp(logits, axis=-1)
              - logits[jnp.arange(N), jnp.argmax(onehot, axis=-1)])
    ref_l2_reg = (logits - reg_targets) ** 2

    assert l2.shape == (N, C) and l1.shape == (N, C) and ce.shape == (N,)
    assert jnp.allclose(l2, ref_l2, atol=1e-3, rtol=1e-3), "L2 mismatch"
    assert jnp.allclose(l1, ref_l1, atol=1e-3, rtol=1e-3), "L1 mismatch"
    assert jnp.allclose(ce, ref_ce, atol=1e-3, rtol=1e-3), "CE mismatch"
    assert jnp.allclose(l2_reg, ref_l2_reg, atol=1e-4, rtol=1e-4), "L2(regression) mismatch"
    assert jnp.allclose(l1_sum, jnp.sum(ref_l1), atol=1e-3, rtol=1e-3), "L1 sum mismatch"
    assert jnp.allclose(l2_mean, jnp.mean(ref_l2), atol=1e-5, rtol=1e-3), "L2 mean mismatch"

    # exercise the ragged row-tiled path (no wrapper-side padding; N % tile != 0)
    N2 = 40
    logits2 = jax.random.normal(k4, (N2, C), dtype=jnp.float32)
    onehot2 = jax.nn.one_hot(jax.random.randint(k5, (N2,), 0, C), C, dtype=jnp.float32)
    l2_tiled = losses_forward(logits2, onehot2, type_loss="L2", max_tile_rows=16)
    ce_tiled = losses_forward(logits2, onehot2, type_loss="CE", max_tile_rows=16)
    l1_sum_tiled = losses_forward(logits2, onehot2, type_loss="L1",
                                  reduction="sum", max_tile_rows=16)
    for v in (l2_tiled, ce_tiled, l1_sum_tiled):
        jax.block_until_ready(v)
    p2 = jax.nn.softmax(logits2, axis=-1)
    ref_l2_tiled = (p2 - onehot2) ** 2
    ref_ce_tiled = (jax.nn.logsumexp(logits2, axis=-1)
                    - logits2[jnp.arange(N2), jnp.argmax(onehot2, axis=-1)])
    assert jnp.allclose(l2_tiled, ref_l2_tiled, atol=1e-3, rtol=1e-3), "tiled L2 mismatch"
    assert jnp.allclose(ce_tiled, ref_ce_tiled, atol=1e-3, rtol=1e-3), "tiled CE mismatch"
    assert jnp.allclose(l1_sum_tiled, jnp.sum(jnp.abs(p2 - onehot2)),
                        atol=1e-2, rtol=1e-3), "tiled L1 sum mismatch"

    # bf16 inputs stream at half the HBM traffic (cast to f32 only inside the kernel)
    l1_bf16 = losses_forward(logits.astype(jnp.bfloat16), onehot.astype(jnp.bfloat16),
                             type_loss="L1")
    jax.block_until_ready(l1_bf16)
    assert l1_bf16.shape == (N, C)
    assert bool(jnp.all(jnp.isfinite(l1_bf16.astype(jnp.float32))))

    # integer labels accepted directly for CE (skips the wrapper-side argmax pass)
    ce_int = losses_forward(logits, labels, type_loss="CE")
    jax.block_until_ready(ce_int)
    assert jnp.allclose(ce_int, ref_ce, atol=1e-3, rtol=1e-3), "CE(int labels) mismatch"

    print("KERNEL_OK")
</pallas_src>

<mosaic_0001>
module attributes {stable_mosaic.version = 11 : i64} {
  func.func @_elementwise_loss_kernel(%arg0: i32, %arg1: memref<8x32xf32, #tpu.memory_space<vmem>>, %arg2: memref<8x32xf32, #tpu.memory_space<vmem>>, %arg3: memref<8x32xf32, #tpu.memory_space<vmem>>) attributes {dimension_semantics = [#tpu.dimension_semantics<parallel>], iteration_bounds = array<i64: 1>, scalar_prefetch = 0 : i64, scratch_operands = 0 : i64, tpu.core_type = #tpu.core_type<tc>, window_params = [{transform_indices = @transform_0, window_bounds = array<i64: 8, 32>}, {transform_indices = @transform_1, window_bounds = array<i64: 8, 32>}, {transform_indices = @transform_2, window_bounds = array<i64: 8, 32>}]} {
    %c0 = arith.constant 0 : index
    %c0_0 = arith.constant 0 : index
    %0 = vector.load %arg1[%c0, %c0_0] : memref<8x32xf32, #tpu.memory_space<vmem>>, vector<8x32xf32>
    %c0_1 = arith.constant 0 : index
    %c0_2 = arith.constant 0 : index
    %1 = vector.load %arg2[%c0_1, %c0_2] : memref<8x32xf32, #tpu.memory_space<vmem>>, vector<8x32xf32>
    %cst = arith.constant dense<0xFF800000> : vector<8xf32>
    %2 = vector.multi_reduction <maximumf>, %0, %cst [1] : vector<8x32xf32> to vector<8xf32>
    %3 = vector.shape_cast %2 : vector<8xf32> to vector<8x1xf32>
    %4 = vector.broadcast %3 : vector<8x1xf32> to vector<8x32xf32>
    %5 = arith.subf %0, %4 : vector<8x32xf32>
    %6 = math.exp %5 : vector<8x32xf32>
    %cst_3 = arith.constant dense<0.000000e+00> : vector<8xf32>
    %7 = vector.multi_reduction <add>, %6, %cst_3 [1] : vector<8x32xf32> to vector<8xf32>
    %8 = vector.shape_cast %7 : vector<8xf32> to vector<8x1xf32>
    %9 = vector.broadcast %8 : vector<8x1xf32> to vector<8x32xf32>
    %10 = arith.divf %6, %9 : vector<8x32xf32>
    %11 = arith.subf %10, %1 : vector<8x32xf32>
    %12 = arith.mulf %11, %11 : vector<8x32xf32>
    %c0_4 = arith.constant 0 : index
    %c0_5 = arith.constant 0 : index
    %13 = vector.load %arg3[%c0_4, %c0_5] : memref<8x32xf32, #tpu.memory_space<vmem>>, vector<8x32xf32>
    tpu.vector_store %arg3[%c0_4, %c0_5], %12 {strides = array<i32>} : memref<8x32xf32, #tpu.memory_space<vmem>>, vector<8x32xf32>,
    return
  }
  func.func @transform_0(%arg0: i32) -> (i32, i32) {
    %c0_i32 = arith.constant 0 : i32
    %c0_i32_0 = arith.constant 0 : i32
    return %arg0, %c0_i32 : i32, i32
  }
  func.func @transform_1(%arg0: i32) -> (i32, i32) {
    %c0_i32 = arith.constant 0 : i32
    %c0_i32_0 = arith.constant 0 : i32
    return %arg0, %c0_i32 : i32, i32
  }
  func.func @transform_2(%arg0: i32) -> (i32, i32) {
    %c0_i32 = arith.constant 0 : i32
    %c0_i32_0 = arith.constant 0 : i32
    return %arg0, %c0_i32 : i32, i32
  }
}

</mosaic_0001>

<llo_original>
// kernel: tpu_custom_call.1
$region0: #{tpu_custom_call.1}
  #allocation0 [shape = 'u32[]', space=smem, size = 0x4, offset = 0x4, fixed_abs, tag = 'smem constant byte address 0x4 - core index']
  #allocation1 [shape = 'u32[144,128]{1,0:T(1,128)}', space=vmem, size = 0x12000, scoped, tag = 'internal scratch']
  %s0 = inlined_call_operand.hbm [shape: f32[8,32], index: 0, kind: input, shape index: {}]
  %s1 = inlined_call_operand.hbm [shape: f32[8,32], index: 1, kind: input, shape index: {}]
  %s2 = inlined_call_operand.hbm [shape: f32[8,32], index: 2, kind: output, shape index: {}]
  %s3 = sld [smem:[#allocation0]]
  $region26: #{tpu_custom_call.1} parent=0
    _
  %s5 = ssub.s32 1, %s3
  %s6 = scalar_select 0, %s5, %s3
  $region1: #{tpu_custom_call.1} parent=0
    #allocation2 [shape = 'u8[4096]{0}', space=vmem, size = 0x1000, scoped, tag = 'input window, operand 0, single buffered']
    #allocation3 [shape = 's32[1]{0}', space=sflag, size = 0x4, scoped, tag = 'scoped memory for tpu_custom_call.1']
    #allocation4 [shape = 's32[1]{0}', space=sflag, size = 0x4, scoped, tag = 'scoped memory for tpu_custom_call.1']
    #allocation5 [shape = 'u8[4096]{0}', space=vmem, size = 0x1000, scoped, tag = 'input window, operand 1, single buffered']
    #allocation6 [shape = 's32[1]{0}', space=sflag, size = 0x4, scoped, tag = 'scoped memory for tpu_custom_call.1']
    #allocation7 [shape = 'u8[4096]{0}', space=vmem, size = 0x1000, scoped, tag = 'output window, operand 0, single buffered']
    %7 = vsyncpa [#allocation3], 0
    %8 = vsyncpa [#allocation6], 0
    %9 = vsyncpa [#allocation4], 0
    // Predicated region
    $region2: #{tpu_custom_call.1} parent=1 // pred_check
      _
    $region3: #{tpu_custom_call.1} parent=1 // pred_check_branch
      %11 = sbr.rel (0) target = $region5
    $region4: #{tpu_custom_call.1} parent=1 // pred_region
      %s13 = ssub.s32 128, 128
      %14 = vsyncadd [#allocation3], %s13
      %s16 = sshll.u32 [#allocation2], 4
      %s17 = int_to_ptr.vmem [resolvable:$true] %s16
      %19 = dma.hbm_to_vmem [thread:$0]  %s0, 128, %s17, [#allocation3]
    $region5: #{tpu_custom_call.1} parent=1 // pred_fallthru
      _
    // Predicated region
    $region6: #{tpu_custom_call.1} parent=1 // pred_check
      _
    $region7: #{tpu_custom_call.1} parent=1 // pred_check_branch
      %21 = sbr.rel (0) target = $region9
    $region8: #{tpu_custom_call.1} parent=1 // pred_region
      %s23 = ssub.s32 128, 128
      %24 = vsyncadd [#allocation6], %s23
      %s26 = sshll.u32 [#allocation5], 4
      %s27 = int_to_ptr.vmem [resolvable:$true] %s26
      %29 = dma.hbm_to_vmem [thread:$0]  %s1, 128, %s27, [#allocation6]
    $region9: #{tpu_custom_call.1} parent=1 // pred_fallthru
      _
    // Predicated region
    $region10: #{tpu_custom_call.1} parent=1 // pred_check
      _
    $region11: #{tpu_custom_call.1} parent=1 // pred_check_branch
      %31 = sbr.rel (0) target = $region13
    $region12: #{tpu_custom_call.1} parent=1 // pred_region
      %32 = dma.done [#allocation3], 128
    $region13: #{tpu_custom_call.1} parent=1 // pred_fallthru
      _
    // Predicated region
    $region14: #{tpu_custom_call.1} parent=1 // pred_check
      _
    $region15: #{tpu_custom_call.1} parent=1 // pred_check_branch
      %34 = sbr.rel (0) target = $region17
    $region16: #{tpu_custom_call.1} parent=1 // pred_region
      %35 = dma.done [#allocation6], 128
    $region17: #{tpu_custom_call.1} parent=1 // pred_fallthru
      _
    %v36 = vld [vmem:[#allocation2] sm:$0xff]
    %v37 = vld [vmem:[#allocation5] sm:$0xff]
    %vm38 = vcmask 261120
    %v39 = vsel %vm38, %v36, -inf
    %40 = vmax.xlane.f32.xlu0 %v39
    %v41 = vpop.xlane.xlu0 %40
    %v42 = vsub.f32 %v36, %v41
    %v43 = vmul.f32 %v42, 1.442695
    %v44 = vpow.pop %v43
    %v45 = vsel %vm38, %v44, 0.0
    %46 = vadd.xlane.f32.xlu0 %v45
    %v47 = vpop.xlane.xlu0 %46
    %v48 = vrcp.pop %v47
    %v49 = vmul.f32 %v44, %v48
    %v50 = vsub.f32 %v49, %v37
    %v51 = vmul.f32 %v50, %v50
    %52 = vst.msk [vmem:[#allocation7] sm:$0xff] %vm38, %v51
    // Predicated region
    $region18: #{tpu_custom_call.1} parent=1 // pred_check
      _
    $region19: #{tpu_custom_call.1} parent=1 // pred_check_branch
      %54 = sbr.rel (0) target = $region21
    $region20: #{tpu_custom_call.1} parent=1 // pred_region
      %s56 = ssub.s32 128, 128
      %57 = vsyncadd [#allocation4], %s56
      %s59 = sshll.u32 [#allocation7], 4
      %s60 = int_to_ptr.vmem [resolvable:$true] %s59
      %62 = dma.vmem_to_hbm [thread:$0]  %s60, 128, %s2, [#allocation4]
    $region21: #{tpu_custom_call.1} parent=1 // pred_fallthru
      _
    // Predicated region
    $region22: #{tpu_custom_call.1} parent=1 // pred_check
      _
    $region23: #{tpu_custom_call.1} parent=1 // pred_check_branch
      %64 = sbr.rel (0) target = $region25
    $region24: #{tpu_custom_call.1} parent=1 // pred_region
      %65 = dma.done [#allocation4], 128
    $region25: #{tpu_custom_call.1} parent=1 // pred_fallthru
      _
    %66 = vsyncpa [#allocation3], 1
    %67 = vsyncpa [#allocation6], 1
    %68 = vsyncpa [#allocation4], 1

</llo_original>
